<compile_context>
chip_gen: v6e
topology: v6e:2x2x1
jax: 0.10.0
libtpu: 0.0.40
codegen_flags: <defaults>
</compile_context>

<pallas_src>
import jax
import jax.numpy as jnp
from jax.experimental import pallas as pl
from jax.experimental.pallas import tpu as pltpu


# ----------------------------------------------------------------------------
# Kernel
# ----------------------------------------------------------------------------
def attention_kernel(h_ref, wa_ref, ba_ref, alpha_ref):
    # h_ref:  (B, T, H) in VMEM
    # wa_ref: (1, H)    in VMEM  (W_a laid out along lanes)
    # ba_ref: (1, 1)    in SMEM  (scalar bias)
    # alpha_ref: (B, T) in VMEM
    h = h_ref[...]                       # (B, T, H)
    wa = wa_ref[...]                     # (1, H) broadcasts over (B, T, H)

    # score = h @ W_a + b_a, done as elementwise mul + reduce over the lane
    # axis instead of an N=1 MXU matmul (perf feedback).
    score = jnp.sum(h * wa, axis=-1) + ba_ref[0, 0]      # (B, T)
    score = jax.nn.sigmoid(score)                        # (B, T)

    # softmax over the sequence axis (PyTorch dim=1)
    m = jnp.max(score, axis=1, keepdims=True)
    e = jnp.exp(score - m)
    alpha_ref[...] = e / jnp.sum(e, axis=1, keepdims=True)


# ----------------------------------------------------------------------------
# Wrapper
# ----------------------------------------------------------------------------
@jax.jit
def attention_forward(h, w_a, b_a):
    B, T, H = h.shape
    wa_row = w_a.reshape(1, H).astype(jnp.float32)   # (H,1) -> (1,H), lane-major
    ba = b_a.reshape(1, 1).astype(jnp.float32)       # scalar -> (1,1) for SMEM

    return pl.pallas_call(
        attention_kernel,
        out_shape=jax.ShapeDtypeStruct((B, T), jnp.float32),
        in_specs=[
            pl.BlockSpec(memory_space=pltpu.MemorySpace.VMEM),   # h
            pl.BlockSpec(memory_space=pltpu.MemorySpace.VMEM),   # W_a row
            pl.BlockSpec(memory_space=pltpu.MemorySpace.SMEM),   # b_a scalar
        ],
        out_specs=pl.BlockSpec(memory_space=pltpu.MemorySpace.VMEM),
    )(h.astype(jnp.float32), wa_row, ba)


# ----------------------------------------------------------------------------
# Pure-JAX reference (mirrors the PyTorch forward)
# ----------------------------------------------------------------------------
def reference_forward(h, w_a, b_a):
    score = jnp.matmul(h, w_a) + b_a                 # (B, T, 1)
    score = jax.nn.sigmoid(score)[..., 0]            # (B, T)
    return jax.nn.softmax(score, axis=1)             # softmax over dim=1


# ----------------------------------------------------------------------------
# Deterministic inputs + run
# ----------------------------------------------------------------------------
if __name__ == "__main__":
    B, T, H = 2, 8, 32

    root = jax.random.PRNGKey(0)
    kh, kw = jax.random.split(root)

    h = jax.random.normal(kh, (B, T, H), jnp.float32)
    w_a = jax.random.normal(kw, (H, 1), jnp.float32)   # nn.Parameter(torch.randn(H, 1))
    b_a = jnp.zeros((1,), jnp.float32)                 # nn.Parameter(torch.zeros(1))

    alpha = attention_forward(h, w_a, b_a)
    alpha = jax.block_until_ready(alpha)

    alpha_ref = reference_forward(h, w_a, b_a)
    assert alpha.shape == (B, T)
    assert jnp.allclose(alpha, alpha_ref, atol=1e-5, rtol=1e-5), (
        f"max abs err {float(jnp.max(jnp.abs(alpha - alpha_ref)))}")
    # rows of alpha sum to 1
    assert jnp.allclose(jnp.sum(alpha, axis=1), jnp.ones((B,)), atol=1e-5)

    print("KERNEL_OK")
</pallas_src>

<mosaic_0001>
module attributes {stable_mosaic.version = 11 : i64} {
  func.func @attention_kernel(%arg0: memref<2x8x32xf32, #tpu.memory_space<vmem>>, %arg1: memref<1x32xf32, #tpu.memory_space<vmem>>, %arg2: memref<1x1xf32, #tpu.memory_space<smem>>, %arg3: memref<2x8xf32, #tpu.memory_space<vmem>>) attributes {dimension_semantics = [], scalar_prefetch = 0 : i64, scratch_operands = 0 : i64, tpu.core_type = #tpu.core_type<tc>} {
    %c0 = arith.constant 0 : index
    %c0_0 = arith.constant 0 : index
    %c0_1 = arith.constant 0 : index
    %0 = vector.load %arg0[%c0, %c0_0, %c0_1] : memref<2x8x32xf32, #tpu.memory_space<vmem>>, vector<2x8x32xf32>
    %c0_2 = arith.constant 0 : index
    %c0_3 = arith.constant 0 : index
    %1 = vector.load %arg1[%c0_2, %c0_3] : memref<1x32xf32, #tpu.memory_space<vmem>>, vector<1x32xf32>
    %2 = vector.shape_cast %1 : vector<1x32xf32> to vector<1x1x32xf32>
    %3 = vector.broadcast %2 : vector<1x1x32xf32> to vector<2x8x32xf32>
    %4 = arith.mulf %0, %3 : vector<2x8x32xf32>
    %cst = arith.constant dense<0.000000e+00> : vector<2x8xf32>
    %5 = vector.multi_reduction <add>, %4, %cst [2] : vector<2x8x32xf32> to vector<2x8xf32>
    %c0_4 = arith.constant 0 : index
    %c0_5 = arith.constant 0 : index
    %6 = memref.load %arg2[%c0_4, %c0_5] : memref<1x1xf32, #tpu.memory_space<smem>>
    %7 = vector.broadcast %6 : f32 to vector<2x8xf32>
    %8 = arith.addf %5, %7 : vector<2x8xf32>
    %9 = arith.negf %8 : vector<2x8xf32>
    %10 = math.exp %9 : vector<2x8xf32>
    %cst_6 = arith.constant 1.000000e+00 : f32
    %11 = vector.broadcast %cst_6 : f32 to vector<2x8xf32>
    %12 = arith.addf %11, %10 : vector<2x8xf32>
    %13 = arith.divf %11, %12 : vector<2x8xf32>
    %cst_7 = arith.constant dense<0xFF800000> : vector<2xf32>
    %14 = vector.multi_reduction <maximumf>, %13, %cst_7 [1] : vector<2x8xf32> to vector<2xf32>
    %15 = vector.shape_cast %14 : vector<2xf32> to vector<2x1xf32>
    %16 = vector.broadcast %15 : vector<2x1xf32> to vector<2x8xf32>
    %17 = arith.subf %13, %16 : vector<2x8xf32>
    %18 = math.exp %17 : vector<2x8xf32>
    %cst_8 = arith.constant dense<0.000000e+00> : vector<2xf32>
    %19 = vector.multi_reduction <add>, %18, %cst_8 [1] : vector<2x8xf32> to vector<2xf32>
    %20 = vector.shape_cast %19 : vector<2xf32> to vector<2x1xf32>
    %21 = vector.broadcast %20 : vector<2x1xf32> to vector<2x8xf32>
    %22 = arith.divf %18, %21 : vector<2x8xf32>
    %c0_9 = arith.constant 0 : index
    %c0_10 = arith.constant 0 : index
    %23 = vector.load %arg3[%c0_9, %c0_10] : memref<2x8xf32, #tpu.memory_space<vmem>>, vector<2x8xf32>
    tpu.vector_store %arg3[%c0_9, %c0_10], %22 {strides = array<i32>} : memref<2x8xf32, #tpu.memory_space<vmem>>, vector<2x8xf32>,
    return
  }
}

</mosaic_0001>

<llo_original>
// kernel: attention_forward.1
$region0: #{attention_forward.1}
  #allocation0 [shape = 'u32[]', space=smem, size = 0x4, offset = 0x4, fixed_abs, tag = 'smem constant byte address 0x4 - core index']
  #allocation1 [shape = 'u32[144,128]{1,0:T(1,128)}', space=vmem, size = 0x12000, scoped, tag = 'internal scratch']
  #allocation2 [shape = 'f32[1,1]{1,0:T(1,128)S(6)}', space=smem, size = 0x200, scoped, tag = 'scoped memory for attention_forward.1']
  %s0 = inlined_call_operand.hbm [shape: f32[2,8,32], index: 0, kind: input, shape index: {}]
  %s1 = inlined_call_operand.vmem [shape: f32[1,32], index: 1, kind: input, shape index: {}]
  %s2 = inlined_call_operand.<no memory space> [shape: f32[1,1], index: 2, kind: input, shape index: {}]
  %s3 = inlined_call_operand.hbm [shape: f32[2,8], index: 3, kind: output, shape index: {}]
  %s4 = sld [smem:[#allocation0]]
  $region26: #{attention_forward.1} parent=0
    _
  %s6 = ssub.s32 1, %s4
  %s7 = scalar_select 0, %s6, %s4
  %8 = sst [smem:[#allocation2]] %s2
  $region1: #{attention_forward.1} parent=0
    #allocation3 [shape = 'u8[8192]{0}', space=vmem, size = 0x2000, scoped, tag = 'input window, operand 0, single buffered']
    #allocation4 [shape = 's32[1]{0}', space=sflag, size = 0x4, scoped, tag = 'scoped memory for attention_forward.1']
    #allocation5 [shape = 's32[1]{0}', space=sflag, size = 0x4, scoped, tag = 'scoped memory for attention_forward.1']
    #allocation6 [shape = 'u8[1024]{0}', space=vmem, size = 0x400, scoped, tag = 'output window, operand 0, single buffered']
    %9 = vsyncpa [#allocation4], 0
    %10 = vsyncpa [#allocation5], 0
    // Predicated region
    $region2: #{attention_forward.1} parent=1 // pred_check
      _
    $region3: #{attention_forward.1} parent=1 // pred_check_branch
      %12 = sbr.rel (0) target = $region5
    $region4: #{attention_forward.1} parent=1 // pred_region
      %s14 = ssub.s32 256, 256
      %15 = vsyncadd [#allocation4], %s14
      %s16 = sshll.u32 [#allocation3], 4
      %s17 = int_to_ptr.vmem [resolvable:$true] %s16
      %22 = dma.hbm_to_vmem [thread:$0]  %s0, 256, %s17, [#allocation4], 128, 128, 8
    $region5: #{attention_forward.1} parent=1 // pred_fallthru
      _
    // Predicated region
    $region6: #{attention_forward.1} parent=1 // pred_check
      _
    $region7: #{attention_forward.1} parent=1 // pred_check_branch
      %24 = sbr.rel (0) target = $region9
    $region8: #{attention_forward.1} parent=1 // pred_region
      _
    $region9: #{attention_forward.1} parent=1 // pred_fallthru
      _
    // Predicated region
    $region10: #{attention_forward.1} parent=1 // pred_check
      _
    $region11: #{attention_forward.1} parent=1 // pred_check_branch
      %26 = sbr.rel (0) target = $region13
    $region12: #{attention_forward.1} parent=1 // pred_region
      _
    $region13: #{attention_forward.1} parent=1 // pred_fallthru
      _
    // Predicated region
    $region14: #{attention_forward.1} parent=1 // pred_check
      _
    $region15: #{attention_forward.1} parent=1 // pred_check_branch
      %28 = sbr.rel (0) target = $region17
    $region16: #{attention_forward.1} parent=1 // pred_region
      %29 = dma.done [#allocation4], 256
    $region17: #{attention_forward.1} parent=1 // pred_fallthru
      _
    %v30 = vld [vmem:[#allocation3] sm:$0xff]
    %v31 = vld [vmem:[#allocation3 + $0x8] sm:$0xff]
    %v32 = vld [vmem:[%s1] sm:$0x1]
    %v34 = vlaneseq
    %v35 = vshrl.u32 %v34, 7
    %v36 = vsub.s32 0, %v35
    %v37 = vrot.slane %v32, %v36
    %v39 = vmul.f32 %v30, %v37
    %v40 = vmul.f32 %v31, %v37
    %vm41 = vcmask 261120
    %v42 = vsel %vm41, %v39, 0.0
    %43 = vadd.xlane.f32.xlu0 %v42
    %v44 = vpop.xlane.xlu0 %43
    %v45 = vsel %vm41, %v40, 0.0
    %46 = vadd.xlane.f32.xlu0 %v45
    %v47 = vpop.xlane.xlu0 %46
    %s48 = sld [smem:[#allocation2]]
    %v49 = vstv %s48
    %v50 = vadd.f32 %v44, %v49
    %v51 = vadd.f32 %v47, %v49
    %v52 = vxor.u32 %v50, 2147483648
    %v53 = vxor.u32 %v51, 2147483648
    %v54 = vmul.f32 %v52, 1.442695
    %v55 = vpow.pop %v54
    %v56 = vmul.f32 %v53, 1.442695
    %v57 = vpow.pop %v56
    %v58 = vadd.f32 %v55, 1.0
    %v59 = vadd.f32 %v57, 1.0
    %v60 = vrcp.pop %v58
    %v61 = vmul.f32 1.0, %v60
    %v62 = vrcp.pop %v59
    %v63 = vmul.f32 1.0, %v62
    %v66 = vlaneseq
    %v67 = vand.u32 %v66, 127
    %v68 = vlaneseq
    %v69 = vshrl.u32 %v68, 7
    %v70 = vsub.s32 %v67, %v69
    %v71 = vrot.slane %v61, %v70
    %v72 = vlaneseq
    %v73 = vshrl.u32 %v72, 7
    %v74 = vsub.s32 %v67, %v73
    %v75 = vrot.slane %v63, %v74
    %vm76 = vcmask 1041409
    %v77 = vsel %vm76, %v75, %v71
    %vm79 = vcmask 58368
    %v80 = vsel %vm79, %v77, -inf
    %81 = vmax.xlane.f32.xlu0 %v80
    %v82 = vpop.xlane.xlu0 %81
    %v84 = vlaneseq
    %v85 = vshrl.u32 %v84, 7
    %v86 = vsub.s32 0, %v85
    %v87 = vrot.slane %v82, %v86
    %v88 = vlaneseq
    %v89 = vshrl.u32 %v88, 7
    %v90 = vsub.s32 1, %v89
    %v91 = vrot.slane %v82, %v90
    %v94 = vsub.f32 %v61, %v87
    %v95 = vsub.f32 %v63, %v91
    %v96 = vmul.f32 %v94, 1.442695
    %v97 = vpow.pop %v96
    %v98 = vmul.f32 %v95, 1.442695
    %v99 = vpow.pop %v98
    %102 = vset.pattern.permute.xlu0 0
    %103 = vperm.xlu0 %102, %v97
    %v104 = vpop.permute.xlu0 %103
    %105 = vset.pattern.permute.xlu0 0
    %106 = vperm.xlu0 %105, %v99
    %v107 = vpop.permute.xlu0 %106
    %v108 = vlaneseq
    %v109 = vshrl.u32 %v108, 7
    %v110 = vsub.s32 %v67, %v109
    %v111 = vrot.slane %v104, %v110
    %v112 = vlaneseq
    %v113 = vshrl.u32 %v112, 7
    %v114 = vsub.s32 %v67, %v113
    %v115 = vrot.slane %v107, %v114
    %v116 = vsel %vm76, %v115, %v111
    %v118 = vsel %vm79, %v116, 0.0
    %119 = vadd.xlane.f32.xlu0 %v118
    %v120 = vpop.xlane.xlu0 %119
    %v122 = vlaneseq
    %v123 = vshrl.u32 %v122, 7
    %v124 = vsub.s32 0, %v123
    %v125 = vrot.slane %v120, %v124
    %v126 = vlaneseq
    %v127 = vshrl.u32 %v126, 7
    %v128 = vsub.s32 1, %v127
    %v129 = vrot.slane %v120, %v128
    %v132 = vrcp.pop %v125
    %v133 = vmul.f32 %v97, %v132
    %v134 = vrcp.pop %v129
    %v135 = vmul.f32 %v99, %v134
    %138 = vset.pattern.permute.xlu0 0
    %139 = vperm.xlu0 %138, %v133
    %v140 = vpop.permute.xlu0 %139
    %141 = vset.pattern.permute.xlu0 0
    %142 = vperm.xlu0 %141, %v135
    %v143 = vpop.permute.xlu0 %142
    %v144 = vlaneseq
    %v145 = vshrl.u32 %v144, 7
    %v146 = vsub.s32 %v67, %v145
    %v147 = vrot.slane %v140, %v146
    %v148 = vlaneseq
    %v149 = vshrl.u32 %v148, 7
    %v150 = vsub.s32 %v67, %v149
    %v151 = vrot.slane %v143, %v150
    %v152 = vsel %vm76, %v151, %v147
    %154 = vst.msk [vmem:[#allocation6] sm:$0x3] %vm79, %v152
    // Predicated region
    $region18: #{attention_forward.1} parent=1 // pred_check
      _
    $region19: #{attention_forward.1} parent=1 // pred_check_branch
      %156 = sbr.rel (0) target = $region21
    $region20: #{attention_forward.1} parent=1 // pred_region
      %s158 = ssub.s32 32, 32
      %159 = vsyncadd [#allocation5], %s158
      %s161 = sshll.u32 [#allocation6], 4
      %s162 = int_to_ptr.vmem [resolvable:$true] %s161
      %164 = dma.vmem_to_hbm [thread:$0]  %s162, 32, %s3, [#allocation5]
    $region21: #{attention_forward.1} parent=1 // pred_fallthru
      _
    // Predicated region
    $region22: #{attention_forward.1} parent=1 // pred_check
      _
    $region23: #{attention_forward.1} parent=1 // pred_check_branch
      %166 = sbr.rel (0) target = $region25
    $region24: #{attention_forward.1} parent=1 // pred_region
      %167 = dma.done [#allocation5], 32
    $region25: #{attention_forward.1} parent=1 // pred_fallthru
      _
    %168 = vsyncpa [#allocation4], 1
    %169 = vsyncpa [#allocation5], 1

</llo_original>
